<compile_context>
chip_gen: v5e
topology: v5e:2x2
jax: 0.10.0
libtpu: 0.0.40
codegen_flags: <defaults>
</compile_context>

<pallas_src>
import functools

import jax
import jax.numpy as jnp
from jax import lax
from jax.experimental import pallas as pl
from jax.experimental.pallas import tpu as pltpu

_LANE = 128
_SUBLANE = 8


def _sublane_pack(dtype):
    """Rows per fully-packed sublane group: 8 for 4-byte, 16 for 2-byte, 32 for 1-byte."""
    itemsize = jnp.dtype(dtype).itemsize
    return _SUBLANE * max(1, 4 // max(1, itemsize))


def _vmem_budgets():
    """Return (working_set_budget_bytes, vmem_limit_bytes) for this chip generation."""
    try:
        vmem_cap = int(pltpu.get_tpu_info().vmem_capacity_bytes)
    except Exception:
        vmem_cap = 64 * 1024 * 1024            # conservative fallback (v7x-sized)
    if vmem_cap <= 64 * 1024 * 1024:           # v7x: 64 MiB per TensorCore
        return 26 * 1024 * 1024, 32 * 1024 * 1024
    return 56 * 1024 * 1024, 64 * 1024 * 1024  # v5e / v6e: 128 MiB


def _fea_loss_kernel(x_ref, part_ref, *, beta, bound, loss_type, n_rows, tile_rows):
    i = pl.program_id(0)

    x = x_ref[...].astype(jnp.float32)            # (tm, C), compute in f32
    m = (-beta) * x                               # -beta * inputs

    # Numerically stable logsumexp over the class axis (axis=1).
    row_max = jnp.max(m, axis=1, keepdims=True)                                   # (tm, 1)
    lse = row_max + jnp.log(jnp.sum(jnp.exp(m - row_max), axis=1, keepdims=True))  # (tm, 1)
    free_energy = (-1.0 / beta) * lse                                             # (tm, 1)

    diff = free_energy - jnp.float32(bound)

    if loss_type == "l1":
        per_elem = jnp.abs(diff)
    elif loss_type == "mse":
        per_elem = diff * diff
    elif loss_type == "max":
        per_elem = jnp.maximum(diff, 0.0)
    else:
        raise ValueError(f"unknown loss type: {loss_type}")

    # Mask rows beyond N (last, possibly partial, tile reads padded garbage;
    # the select stops any NaN/Inf from that garbage propagating into the sum).
    row_ids = i * tile_rows + lax.broadcasted_iota(jnp.int32, (tile_rows, 1), 0)
    per_elem = jnp.where(row_ids < n_rows, per_elem, 0.0)

    # Lane-dense per-tile partial sum; distinct output block per grid step so
    # the grid axis is truly parallel (no cross-iteration state).
    psum = jnp.sum(per_elem)
    part_ref[...] = jnp.broadcast_to(psum, (_SUBLANE, _LANE)).astype(jnp.float32)


def free_energy_alignment_loss(inputs, bound, *, beta, loss_type, tile_rows=None):
    """inputs: [N, C] float array (f32 or bf16); bound: host scalar; returns scalar loss.

    Callers on v5e are encouraged to pass bf16 activations: the kernel is
    HBM-bound there and upcasts to f32 internally, so bf16 input halves bytes.
    """
    assert beta > 0.0, "beta for energy calculate must be larger than 0"
    n, c = inputs.shape
    itemsize = jnp.dtype(inputs.dtype).itemsize
    pack = _sublane_pack(inputs.dtype)

    work_budget, vmem_limit = _vmem_budgets()

    # Per-row working set: double-buffered native-dtype input (2*itemsize/elem)
    # plus the in-kernel f32 intermediates (x_f32, m - row_max, exp temp ~ 12 B/elem).
    bytes_per_row = c * (2 * itemsize + 12)

    if tile_rows is None:
        tm = max(pack, work_budget // max(1, bytes_per_row))
    else:
        tm = max(1, int(tile_rows))

    if tm >= n:
        if n > pack:
            # Keep >= 2 grid steps so both v7x TensorCores get work; a single
            # extra grid step (~0.35 us) is negligible on single-core chips.
            tm = min(n, ((pl.cdiv(n, 2) + pack - 1) // pack) * pack)
        else:
            tm = n                                     # tiny batch: one full-array tile
    else:
        tm = max(pack, (tm // pack) * pack)            # packing-aligned tile

    num_tiles = pl.cdiv(n, tm)

    kernel = functools.partial(
        _fea_loss_kernel,
        beta=float(beta),
        bound=float(bound),
        loss_type=loss_type,
        n_rows=n,
        tile_rows=tm,
    )

    cost = pl.CostEstimate(
        flops=6 * n * c,
        transcendentals=n * c + n,
        bytes_accessed=n * c * itemsize + num_tiles * _SUBLANE * _LANE * 4,
    )

    partials = pl.pallas_call(
        kernel,
        out_shape=jax.ShapeDtypeStruct((num_tiles * _SUBLANE, _LANE), jnp.float32),
        grid_spec=pltpu.PrefetchScalarGridSpec(
            num_scalar_prefetch=0,
            grid=(num_tiles,),
            in_specs=[pl.BlockSpec((tm, c), lambda i: (i, 0))],
            out_specs=pl.BlockSpec((_SUBLANE, _LANE), lambda i: (i, 0)),
        ),
        compiler_params=pltpu.CompilerParams(
            dimension_semantics=("parallel",),          # no cross-step state -> megacore OK
            vmem_limit_bytes=vmem_limit,
        ),
        cost_estimate=cost,
    )(inputs)

    # Every element of each (8,128) block equals that tile's partial sum, so a
    # dense sum (trivial fused reduce, no strided slice) over-counts by exactly
    # 8*128; divide it back out together with the mean's 1/N.
    return jnp.sum(partials) / jnp.float32(n * _SUBLANE * _LANE)

    # TODO(synk): when C < 128 and compute (EUP/VPU) rather than HBM binds (bf16 on
    # v7x), pack 128//C logical rows per vreg row and/or compute exp in bf16 — kept
    # out here because the in-kernel reshape risks relayouts that need MLIR checks.


def _reference_loss(inputs, bound, *, beta, loss_type):
    m = -beta * inputs.astype(jnp.float32)
    lse = jax.nn.logsumexp(m, axis=1)
    fe = -lse / beta
    diff = fe - bound
    if loss_type == "l1":
        return jnp.mean(jnp.abs(diff))
    if loss_type == "mse":
        return jnp.mean(diff * diff)
    return jnp.mean(jnp.maximum(diff, 0.0))


if __name__ == "__main__":
    key = jax.random.PRNGKey(0)
    beta = 1.0
    bound = -2.5
    ok = True

    k1, k2 = jax.random.split(key)

    # Small, module-consistent shape: 16 samples x 32-way classifier logits.
    x_f32 = jax.random.normal(k1, (16, 32), dtype=jnp.float32) * 3.0
    for loss_type in ("l1", "mse", "max"):
        got = jax.block_until_ready(
            free_energy_alignment_loss(x_f32, bound, beta=beta, loss_type=loss_type))
        want = _reference_loss(x_f32, bound, beta=beta, loss_type=loss_type)
        if not bool(jnp.allclose(got, want, rtol=1e-5, atol=1e-5)):
            ok = False
            print(f"MISMATCH f32 type={loss_type}: kernel={got} ref={want}")

    # Non-divisible batch + multi-tile path (exercises the in-kernel row mask
    # and the parallel per-tile partial sums).
    x_ragged = jax.random.normal(k2, (20, 32), dtype=jnp.float32) * 2.0
    got = jax.block_until_ready(
        free_energy_alignment_loss(x_ragged, bound, beta=0.5, loss_type="mse",
                                   tile_rows=8))
    want = _reference_loss(x_ragged, bound, beta=0.5, loss_type="mse")
    if not bool(jnp.allclose(got, want, rtol=1e-5, atol=1e-5)):
        ok = False
        print(f"MISMATCH ragged mse: kernel={got} ref={want}")

    # Auto-tiled ragged batch (exercises the >=2-tile split + budget-sized tm).
    got = jax.block_until_ready(
        free_energy_alignment_loss(x_ragged, bound, beta=0.5, loss_type="max"))
    want = _reference_loss(x_ragged, bound, beta=0.5, loss_type="max")
    if not bool(jnp.allclose(got, want, rtol=1e-5, atol=1e-5)):
        ok = False
        print(f"MISMATCH ragged max (auto tile): kernel={got} ref={want}")

    # bf16 activations: DMA'd in bf16 (half HBM bytes), computed in f32.
    x_bf16 = (jax.random.normal(k1, (16, 32), dtype=jnp.float32) * 3.0).astype(jnp.bfloat16)
    got = jax.block_until_ready(
        free_energy_alignment_loss(x_bf16, bound, beta=beta, loss_type="l1"))
    want = _reference_loss(x_bf16.astype(jnp.float32), bound, beta=beta, loss_type="l1")
    if not bool(jnp.allclose(got, want, rtol=1e-4, atol=1e-4)):
        ok = False
        print(f"MISMATCH bf16 l1: kernel={got} ref={want}")

    if ok:
        print("KERNEL_OK")
</pallas_src>

<mosaic_0001>
module attributes {stable_mosaic.version = 11 : i64} {
  func.func @_fea_loss_kernel(%arg0: i32, %arg1: memref<8x32xf32, #tpu.memory_space<vmem>>, %arg2: memref<8x128xf32, #tpu.memory_space<vmem>>) attributes {dimension_semantics = [#tpu.dimension_semantics<parallel>], iteration_bounds = array<i64: 2>, scalar_prefetch = 0 : i64, scratch_operands = 0 : i64, tpu.core_type = #tpu.core_type<tc>, window_params = [{transform_indices = @transform_0, window_bounds = array<i64: 8, 32>}, {transform_indices = @transform_1, window_bounds = array<i64: 8, 128>}]} {
    %c0 = arith.constant 0 : index
    %c0_0 = arith.constant 0 : index
    %0 = vector.load %arg1[%c0, %c0_0] : memref<8x32xf32, #tpu.memory_space<vmem>>, vector<8x32xf32>
    %cst = arith.constant -1.000000e+00 : f32
    %1 = vector.broadcast %cst : f32 to vector<8x32xf32>
    %2 = arith.mulf %1, %0 : vector<8x32xf32>
    %cst_1 = arith.constant dense<0xFF800000> : vector<8xf32>
    %3 = vector.multi_reduction <maximumf>, %2, %cst_1 [1] : vector<8x32xf32> to vector<8xf32>
    %4 = vector.shape_cast %3 : vector<8xf32> to vector<8x1xf32>
    %5 = vector.broadcast %4 : vector<8x1xf32> to vector<8x32xf32>
    %6 = arith.subf %2, %5 : vector<8x32xf32>
    %7 = math.exp %6 : vector<8x32xf32>
    %cst_2 = arith.constant dense<0.000000e+00> : vector<8xf32>
    %8 = vector.multi_reduction <add>, %7, %cst_2 [1] : vector<8x32xf32> to vector<8xf32>
    %9 = vector.shape_cast %8 : vector<8xf32> to vector<8x1xf32>
    %10 = math.log %9 : vector<8x1xf32>
    %11 = arith.addf %4, %10 : vector<8x1xf32>
    %cst_3 = arith.constant -1.000000e+00 : f32
    %12 = vector.broadcast %cst_3 : f32 to vector<8x1xf32>
    %13 = arith.mulf %12, %11 : vector<8x1xf32>
    %cst_4 = arith.constant -2.500000e+00 : f32
    %14 = vector.broadcast %cst_4 : f32 to vector<8x1xf32>
    %15 = arith.subf %13, %14 : vector<8x1xf32>
    %16 = math.absf %15 : vector<8x1xf32>
    %c8_i32 = arith.constant 8 : i32
    %17 = arith.muli %arg0, %c8_i32 : i32
    %18 = tpu.iota {dimensions = array<i32: 0>} : vector<8x1xi32>
    %19 = vector.broadcast %17 : i32 to vector<8x1xi32>
    %20 = arith.addi %19, %18 : vector<8x1xi32>
    %c16_i32 = arith.constant 16 : i32
    %21 = vector.broadcast %c16_i32 : i32 to vector<8x1xi32>
    %22 = arith.cmpi slt, %20, %21 : vector<8x1xi32>
    %cst_5 = arith.constant 0.000000e+00 : f32
    %23 = vector.broadcast %cst_5 : f32 to vector<8x1xf32>
    %24 = arith.select %22, %16, %23 : vector<8x1xi1>, vector<8x1xf32>
    %25 = vector.shape_cast %24 : vector<8x1xf32> to vector<1x8x1xf32>
    %cst_6 = arith.constant dense<0.000000e+00> : vector<1xf32>
    %26 = vector.multi_reduction <add>, %25, %cst_6 [1, 2] : vector<1x8x1xf32> to vector<1xf32>
    %27 = vector.shape_cast %26 : vector<1xf32> to vector<1x1x1xf32>
    %28 = vector.extract %27[0, 0, 0] : f32 from vector<1x1x1xf32>
    %29 = vector.broadcast %28 : f32 to vector<8x128xf32>
    %c0_7 = arith.constant 0 : index
    %c0_8 = arith.constant 0 : index
    %30 = vector.load %arg2[%c0_7, %c0_8] : memref<8x128xf32, #tpu.memory_space<vmem>>, vector<8x128xf32>
    tpu.vector_store %arg2[%c0_7, %c0_8], %29 {strides = array<i32>} : memref<8x128xf32, #tpu.memory_space<vmem>>, vector<8x128xf32>,
    return
  }
  func.func @transform_0(%arg0: i32) -> (i32, i32) {
    %c0_i32 = arith.constant 0 : i32
    %c0_i32_0 = arith.constant 0 : i32
    return %arg0, %c0_i32 : i32, i32
  }
  func.func @transform_1(%arg0: i32) -> (i32, i32) {
    %c0_i32 = arith.constant 0 : i32
    %c0_i32_0 = arith.constant 0 : i32
    return %arg0, %c0_i32 : i32, i32
  }
}

</mosaic_0001>

<llo_original>
// kernel: tpu_custom_call.1
$region0: #{tpu_custom_call.1}
  #allocation0 [shape = 'u32[]', space=smem, size = 0x4, offset = 0x4, fixed_abs, tag = 'smem constant byte address 0x4 - core index']
  #allocation1 [shape = 'u32[72,128]{1,0:T(1,128)}', space=vmem, size = 0x9000, scoped, tag = 'internal scratch']
  %s0 = inlined_call_operand.hbm [shape: f32[16,32], index: 0, kind: input, shape index: {}]
  %s1 = inlined_call_operand.hbm [shape: f32[16,128], index: 1, kind: output, shape index: {}]
  %s2 = sld [smem:[#allocation0]]
  $region41: #{tpu_custom_call.1} parent=0
    _
  %s4 = ssub.s32 1, %s2
  %s5 = scalar_select 0, %s4, %s2
  $region1: #{tpu_custom_call.1} parent=0
    #allocation2 [shape = 'u8[8192]{0}', space=vmem, size = 0x2000, scoped, tag = 'input window, operand 0']
    #allocation3 [shape = 's32[2]{0}', space=sflag, size = 0x8, scoped, tag = 'scoped memory for tpu_custom_call.1']
    #allocation4 [shape = 's32[2]{0}', space=sflag, size = 0x8, scoped, tag = 'scoped memory for tpu_custom_call.1']
    #allocation5 [shape = 'u8[8192]{0}', space=vmem, size = 0x2000, scoped, tag = 'output window, operand 0']
    %6 = vsyncpa [#allocation3], 0
    %s7 = scalar_lea.sflag [#allocation3], 1
    %8 = vsyncpa %s7, 0
    %9 = vsyncpa [#allocation4], 0
    %s10 = scalar_lea.sflag [#allocation4], 1
    %11 = vsyncpa %s10, 0
    loop: start=0, step=1, limit=4
    $region2: #{tpu_custom_call.1} parent=1 // loop_pre_header
      _
    $region3: #{tpu_custom_call.1} parent=1 // loop_header
      %s13 = sphi 0, %s17
      %p14 = scmp.ge.s32.totalorder %s13, 4
      %s23 = sphi 0, %s25
      %s26 = sphi 0, %s23
      %s27 = sphi 0, %s26
      %s43 = sphi 0, %s27
      %s49 = sphi 0, %s51
      %s52 = sphi 0, %s49
      %s53 = sphi 0, %s52
      %s69 = sphi 0, %s53
    $region4: #{tpu_custom_call.1} parent=1 // loop_header_branch
      %16 = sbr.rel (%p14) target = $region8
    $region5: #{tpu_custom_call.1} parent=1 // loop_body
      %s18 = ssub.s32 %s13, 1
      %s19 = ssub.s32 %s13, 2
      %s20 = sadd.s32 %s13, 1
      %s21 = ssub.s32 %s13, %s20
      %p22 = scmp.eq.s32.totalorder %s21, 0
      %s24 = sadd.s32 %s23, 1
      %s25 = scalar_select %p22, %s23, %s24
      %p28 = pneg %p22
      %p29 = scmp.eq.s32.totalorder %s13, 1
      %p30 = por %p28, %p29
      %p31 = scmp.ne.s32.totalorder %s23, %s26
      %p32 = scmp.eq.s32.totalorder %s13, 0
      %p33 = por %p31, %p32
      %p34 = scmp.ne.s32.totalorder %s23, %s26
      %p35 = scmp.eq.s32.totalorder %s18, 1
      %p36 = por %p34, %p35
      %p37 = scmp.ne.s32.totalorder %s26, %s27
      %p38 = scmp.eq.s32.totalorder %s18, 0
      %p39 = por %p37, %p38
      %p40 = scmp.ne.s32.totalorder %s26, %s27
      %p41 = scmp.eq.s32.totalorder %s19, 1
      %p42 = por %p40, %p41
      %p44 = scmp.ne.s32.totalorder %s27, %s43
      %p45 = scmp.eq.s32.totalorder %s19, 0
      %p46 = por %p44, %p45
      %s47 = ssub.s32 %s13, %s20
      %p48 = scmp.eq.s32.totalorder %s47, 0
      %s50 = sadd.s32 %s49, 1
      %s51 = scalar_select %p48, %s49, %s50
      %p54 = pneg %p48
      %p55 = scmp.eq.s32.totalorder %s13, 1
      %p56 = por %p54, %p55
      %p57 = scmp.ne.s32.totalorder %s49, %s52
      %p58 = scmp.eq.s32.totalorder %s13, 0
      %p59 = por %p57, %p58
      %p60 = scmp.ne.s32.totalorder %s49, %s52
      %p61 = scmp.eq.s32.totalorder %s18, 1
      %p62 = por %p60, %p61
      %p63 = scmp.ne.s32.totalorder %s52, %s53
      %p64 = scmp.eq.s32.totalorder %s18, 0
      %p65 = por %p63, %p64
      %p66 = scmp.ne.s32.totalorder %s52, %s53
      %p67 = scmp.eq.s32.totalorder %s19, 1
      %p68 = por %p66, %p67
      %p70 = scmp.ne.s32.totalorder %s53, %s69
      %p71 = scmp.eq.s32.totalorder %s19, 0
      %p72 = por %p70, %p71
      %p73 = scmp.le.s32.totalorder 1, %s13
      %p74 = scmp.lt.s32.totalorder %s13, 3
      %p75 = pnand %p73, %p74
      %p76 = pneg %p75
      // Predicated region
      $region9: #{tpu_custom_call.1} parent=5 // pred_check
        _
      $region10: #{tpu_custom_call.1} parent=5 // pred_check_branch
        %78 = sbr.rel (%p75) target = $region12
      $region11: #{tpu_custom_call.1} parent=5 // pred_region
        %s79 = ssub.s32 %s13, 1
      $region12: #{tpu_custom_call.1} parent=5 // pred_fallthru
        _
      %p80 = scmp.lt.s32.totalorder %s13, 2
      // Predicated region
      $region13: #{tpu_custom_call.1} parent=5 // pred_check
        %p81 = pneg %p80
      $region14: #{tpu_custom_call.1} parent=5 // pred_check_branch
        %83 = sbr.rel (%p81) target = $region16
      $region15: #{tpu_custom_call.1} parent=5 // pred_region
        // Predicated region
        $region17: #{tpu_custom_call.1} parent=15 // pred_check
          %p84 = pneg %p33
        $region18: #{tpu_custom_call.1} parent=15 // pred_check_branch
          %86 = sbr.rel (%p84) target = $region20
        $region19: #{tpu_custom_call.1} parent=15 // pred_region
          %s87 = sand.u32 %s23, 1
          %s88 = scalar_lea.sflag [#allocation3], %s87
          %s89 = sand.u32 %s23, 1
          %s90 = smul.addr %s89, 8
          %s91 = scalar_lea.vmem [#allocation2], %s90
          %93 = vsyncadd %s88, 0
          %s94 = smul.addr %s13, 8
          %s95 = scalar_lea.hbm %s0, %s94
          %s97 = sshll.u32 %s95, 4
          %s98 = int_to_ptr.hbm [resolvable:$true] %s97
          %s99 = sshll.u32 %s91, 4
          %s100 = int_to_ptr.vmem [resolvable:$true] %s99
          %102 = dma.hbm_to_vmem [thread:$0]  %s98, 128, %s100, %s88
        $region20: #{tpu_custom_call.1} parent=15 // pred_fallthru
          _
      $region16: #{tpu_custom_call.1} parent=5 // pred_fallthru
        _
      %p103 = scmp.le.s32.totalorder 1, %s13
      %p104 = scmp.lt.s32.totalorder %s13, 3
      %p105 = pnand %p103, %p104
      %p106 = pneg %p105
      // Predicated region
      $region21: #{tpu_custom_call.1} parent=5 // pred_check
        _
      $region22: #{tpu_custom_call.1} parent=5 // pred_check_branch
        %108 = sbr.rel (%p105) target = $region24
      $region23: #{tpu_custom_call.1} parent=5 // pred_region
        %s109 = ssub.s32 %s13, 1
        %s110 = sand.u32 %s26, 1
        %s111 = scalar_lea.sflag [#allocation3], %s110
        %s112 = sand.u32 %s26, 1
        %s113 = smul.addr %s112, 8
        %s114 = scalar_lea.vmem [#allocation2], %s113
        // Predicated region
        $region25: #{tpu_custom_call.1} parent=23 // pred_check
          %p115 = pneg %p39
        $region26: #{tpu_custom_call.1} parent=23 // pred_check_branch
          %117 = sbr.rel (%p115) target = $region28
        $region27: #{tpu_custom_call.1} parent=23 // pred_region
          %119 = dma.done %s111, 128
        $region28: #{tpu_custom_call.1} parent=23 // pred_fallthru
          _
        %s120 = sand.u32 %s26, 1
        %s121 = scalar_lea.sflag [#allocation3], %s120
        %s122 = sand.u32 %s26, 1
        %s123 = smul.addr %s122, 8
        %s124 = scalar_lea.vmem [#allocation2], %s123
        %p125 = pneg %p39
        %p126 = pneg %p36
        %p127 = pneg %p65
        %p128 = pneg %p62
        %s129 = sand.u32 %s52, 1
        %s130 = scalar_lea.sflag [#allocation4], %s129
        %s131 = sand.u32 %s52, 1
        %s132 = smul.addr %s131, 8
        %s133 = scalar_lea.vmem [#allocation5], %s132
        %v134 = vld [vmem:[%s114] sm:$0xff]
        %v135 = vmul.f32 %v134, -1.0
        %vm136 = vcmask 261120
        %v137 = vsel %vm136, %v135, -inf
        %138 = vmax.xlane.f32.xlu0 %v137
        %v139 = vpop.xlane.xlu0 %138
        %v140 = vsub.f32 %v135, %v139
        %v141 = vmul.f32 %v140, 1.442695
        %v142 = vpow.pop %v141
        %v143 = vsel %vm136, %v142, 0.0
        %144 = vadd.xlane.f32.xlu0 %v143
        %v145 = vpop.xlane.xlu0 %144
        %v146 = vlog2.pop %v145
        %v147 = vmul.f32 %v146, 0.6931472
        %v148 = vadd.f32 %v139, %v147
        %v149 = vmul.f32 %v148, -1.0
        %v150 = vsub.f32 %v149, -2.5
        %v151 = vand.u32 2147483647, %v150
        %s152 = smul.u32 %s18, 8
        %v153 = vlaneseq
        %v154 = vshrl.u32 %v153, 7
        %v155 = vstv %s152
        %v156 = vadd.s32 %v155, %v154
        %vm157 = vcmp.lt.s32.totalorder %v156, 16
        %v158 = vsel %vm157, %v151, 0.0
        %vm159 = vcmask 7168
        %v160 = vsel %vm159, %v158, 0.0
        %161 = vadd.xlane.f32.xlu0 %v160
        %v162 = vpop.xlane.xlu0 %161
        %v163 = vrot.slane %v162, 4
        %v164 = vadd.f32 %v162, %v163
        %v165 = vrot.slane %v164, 2
        %v166 = vadd.f32 %v164, %v165
        %v167 = vrot.slane %v166, 1
        %v168 = vadd.f32 %v166, %v167
        %s169 = vtos %v168
        %v170 = vstv %s169
        %171 = vst [vmem:[%s133] sm:$0xff] %v170
        %s172 = sand.u32 %s52, 1
        %s173 = scalar_lea.sflag [#allocation4], %s172
        %s174 = sand.u32 %s52, 1
        %s175 = smul.addr %s174, 8
        %s176 = scalar_lea.vmem [#allocation5], %s175
        // Predicated region
        $region29: #{tpu_custom_call.1} parent=23 // pred_check
          %p177 = pneg %p62
        $region30: #{tpu_custom_call.1} parent=23 // pred_check_branch
          %179 = sbr.rel (%p177) target = $region32
        $region31: #{tpu_custom_call.1} parent=23 // pred_region
          %181 = vsyncadd %s173, 0
          %s182 = smul.addr %s18, 8
          %s183 = scalar_lea.hbm %s1, %s182
          %s185 = sshll.u32 %s176, 4
          %s186 = int_to_ptr.vmem [resolvable:$true] %s185
          %s187 = sshll.u32 %s183, 4
          %s188 = int_to_ptr.hbm [resolvable:$true] %s187
          %190 = dma.vmem_to_hbm [thread:$0]  %s186, 128, %s188, %s173
        $region32: #{tpu_custom_call.1} parent=23 // pred_fallthru
          _
      $region24: #{tpu_custom_call.1} parent=5 // pred_fallthru
        _
      %p191 = scmp.le.s32.totalorder 2, %s13
      // Predicated region
      $region33: #{tpu_custom_call.1} parent=5 // pred_check
        %p192 = pneg %p191
      $region34: #{tpu_custom_call.1} parent=5 // pred_check_branch
        %194 = sbr.rel (%p192) target = $region36
      $region35: #{tpu_custom_call.1} parent=5 // pred_region
        %s195 = ssub.s32 %s13, 2
        // Predicated region
        $region37: #{tpu_custom_call.1} parent=35 // pred_check
          %p196 = pneg %p68
        $region38: #{tpu_custom_call.1} parent=35 // pred_check_branch
          %198 = sbr.rel (%p196) target = $region40
        $region39: #{tpu_custom_call.1} parent=35 // pred_region
          %s199 = sand.u32 %s53, 1
          %s200 = scalar_lea.sflag [#allocation4], %s199
          %s201 = sand.u32 %s53, 1
          %s202 = smul.addr %s201, 8
          %s203 = scalar_lea.vmem [#allocation5], %s202
          %205 = dma.done %s200, 128
        $region40: #{tpu_custom_call.1} parent=35 // pred_fallthru
          _
      $region36: #{tpu_custom_call.1} parent=5 // pred_fallthru
        _
    $region6: #{tpu_custom_call.1} parent=1 // loop_footer
      %s17 = sadd.s32 1, %s13
    $region7: #{tpu_custom_call.1} parent=1 // loop_footer_branch
      %12 = sbr.rel target = $region3
    $region8: #{tpu_custom_call.1} parent=1 // loop_exit
      _
    %206 = vsyncpa [#allocation3], 1
    %s207 = scalar_lea.sflag [#allocation3], 1
    %208 = vsyncpa %s207, 1
    %209 = vsyncpa [#allocation4], 1
    %s210 = scalar_lea.sflag [#allocation4], 1
    %211 = vsyncpa %s210, 1

</llo_original>
